<compile_context>
chip_gen: v6e
topology: v6e:2x2x1
jax: 0.10.0
libtpu: 0.0.40
codegen_flags: <defaults>
</compile_context>

<pallas_src>
import functools

import jax
import jax.numpy as jnp
from jax import lax
from jax.experimental import pallas as pl
from jax.experimental.pallas import tpu as pltpu


def _round_up(x, m):
    return ((x + m - 1) // m) * m


def _cdiv(a, b):
    return -(-a // b)


@functools.lru_cache(maxsize=None)
def _vmem_capacity_bytes():
    """Physical VMEM per core (128 MiB v5e/v6e, 64 MiB v7x)."""
    try:
        return int(pltpu.get_tpu_info().vmem_capacity_bytes)
    except Exception:
        return 64 << 20  # conservative (v7x-sized) fallback


def _dtype_plan(orig_dtype):
    """Return (kernel-input dtype, matmul/work dtype, sel dtype, kernel-out dtype)."""
    d = jnp.dtype(orig_dtype)
    if d == jnp.dtype(jnp.bfloat16):
        return jnp.bfloat16, jnp.bfloat16, jnp.bfloat16, jnp.bfloat16
    if d == jnp.dtype(jnp.float32):
        return jnp.float32, jnp.float32, jnp.float32, jnp.float32
    if d in (jnp.dtype(jnp.uint8), jnp.dtype(jnp.int8)):
        # 8-bit values are exact in bf16 -> full-rate bf16 MXU on every gen,
        # half the HBM bytes of f32.
        # TODO(synk): int8 MXU path (int32 accumulate) would help further on v5e/v6e.
        return d, jnp.bfloat16, jnp.bfloat16, jnp.float32
    # Everything else (f16, f64, wide ints, bool): cast once outside to f32
    # (gather through a 0/1 matrix stays exact up to 2**24 for integers).
    return jnp.float32, jnp.float32, jnp.float32, jnp.float32


def _row_align(dtype):
    """Sublane packing of the kernel's image input: f32->8, bf16->16, 8-bit->32."""
    return max(8, 32 // jnp.dtype(dtype).itemsize)


def _choose_tiling(R_pad, P, in_isz, work_isz, sel_isz, out_isz, needs_cast, row_align):
    """VMEM-budget-aware (tile_p, tile_rows) selection."""
    vmem_cap = _vmem_capacity_bytes()
    # Leave headroom for compiler-internal scratch (especially on 64 MiB v7x).
    budget = max(24 << 20, min(vmem_cap - (8 << 20), int(vmem_cap * 0.75)))
    P_padK = _round_up(P, 128)

    def vmem_need(tp, tr):
        slab = P_padK * tp * sel_isz          # resident one-hot slab (scratch)
        slab_tmp = P_padK * tp * 4            # int32 iota / compare temps
        img = 2 * tr * P_padK * in_isz        # double-buffered image block
        cast_tmp = tr * P_padK * work_isz if needs_cast else 0
        out = 2 * tr * tp * out_isz           # double-buffered output block
        return slab + slab_tmp + img + cast_tmp + out + 2 * tp * 4 + (1 << 20)

    tp_cands = list(range(min(1024, P_padK), 0, -128))
    row_cands = [R_pad] + [r for r in (512, 256, 128, 64, 32, 16, 8)
                           if r < R_pad and r % row_align == 0]

    tile_p = tile_rows = None
    for tr in row_cands:                       # prefer keeping all rows resident
        for tp in tp_cands:                    # then the widest MXU N tile
            if vmem_need(tp, tr) <= budget:
                tile_p, tile_rows = tp, tr
                break
        if tile_p is not None:
            break
    if tile_p is None:
        # TODO(synk): very large images need a source-row K-band tiling
        # (scalar-prefetched band offsets) to fit VMEM; degrade to the
        # smallest tiles instead of failing to pick anything.
        tile_p, tile_rows = 128, row_cands[-1]

    # With the whole row slab resident the image is read from HBM exactly once
    # regardless of the number of pixel tiles -> split the "parallel" pixel
    # axis into >=2 tiles so 2-TensorCore parts (v7x/v5p) can shard it.
    if tile_rows == R_pad and P_padK > 128 and _cdiv(P, tile_p) == 1:
        tile_p = max(128, _round_up(_cdiv(P, 2), 128))

    return tile_p, tile_rows, P_padK, vmem_need(tile_p, tile_rows)


def _source_indices(deg, H, W, num_pixels):
    """src[p] = flat source pixel for output pixel p, or -1 => fill with 0.

    Matches torchvision F.rotate (tensor path): _get_inverse_affine_matrix +
    _gen_affine_grid + grid_sample(mode='nearest', align_corners=False).
    """
    rad = deg.astype(jnp.float32) * (jnp.pi / 180.0)
    cos_a = jnp.cos(rad)
    sin_a = jnp.sin(rad)

    p = jnp.arange(num_pixels, dtype=jnp.int32)
    i = (p // W).astype(jnp.float32)  # output row
    j = (p % W).astype(jnp.float32)   # output col

    # Image-centered coords (+0.5 offset), inverse rotation, then
    # grid_sample(align_corners=False) unnormalization.
    x = j - 0.5 * W + 0.5
    y = i - 0.5 * H + 0.5
    src_x = cos_a * x - sin_a * y + 0.5 * W - 0.5
    src_y = sin_a * x + cos_a * y + 0.5 * H - 0.5

    ix = jnp.round(src_x).astype(jnp.int32)  # nearest: round-half-to-even
    iy = jnp.round(src_y).astype(jnp.int32)
    inb = (ix >= 0) & (ix < W) & (iy >= 0) & (iy < H) & (p < H * W)
    return jnp.where(inb, iy * W + ix, -1)


def _make_rotate_kernel(p_pad_k, tile_p, work_dtype):
    work_dtype = jnp.dtype(work_dtype)

    def kernel(src_ref, img_ref, out_ref, sel_ref):
        # Build the one-hot selection slab for the current output-pixel tile
        # once; reuse it across all row tiles (row axis = inner grid axis).
        @pl.when(pl.program_id(1) == 0)
        def _build_slab():
            q = lax.broadcasted_iota(jnp.int32, (p_pad_k, tile_p), 0)
            sel_ref[...] = (q == src_ref[...]).astype(sel_ref.dtype)

        img = img_ref[...]
        if img.dtype != work_dtype:
            if not jnp.issubdtype(img.dtype, jnp.floating):
                img = img.astype(jnp.float32)
            img = img.astype(work_dtype)

        # Gather-as-matmul on the MXU: out[r, t] = img[r, src[t]] (or 0).
        out_ref[...] = jnp.dot(
            img, sel_ref[...], preferred_element_type=jnp.float32
        ).astype(out_ref.dtype)

    return kernel


@jax.jit
def rotate_pallas(image, deg):
    """Rotate an NCHW image by `deg` degrees (CCW, nearest, expand=False, fill=0)."""
    deg = jnp.asarray(deg)
    B, C, H, W = image.shape
    orig_dtype = image.dtype

    P = H * W
    R = B * C

    in_dtype, work_dtype, sel_dtype, out_dtype = _dtype_plan(orig_dtype)

    img_flat = image.reshape(R, P)
    if img_flat.dtype != jnp.dtype(in_dtype):
        img_flat = img_flat.astype(in_dtype)   # only for exotic dtypes (f16/f64/wide int)

    row_align = _row_align(in_dtype)
    R_pad = _round_up(R, row_align)
    needs_cast = jnp.dtype(in_dtype) != jnp.dtype(work_dtype)

    tile_p, tile_rows, P_padK, vmem_needed = _choose_tiling(
        R_pad, P,
        jnp.dtype(in_dtype).itemsize, jnp.dtype(work_dtype).itemsize,
        jnp.dtype(sel_dtype).itemsize, jnp.dtype(out_dtype).itemsize,
        needs_cast, row_align)

    n_pix_tiles = _cdiv(P, tile_p)
    P_padN = n_pix_tiles * tile_p              # output (N) pixel axis, lane-dense
    n_row_tiles = _cdiv(R_pad, tile_rows)
    R_out = n_row_tiles * tile_rows

    # Zero-pad only when shapes actually require it.  The explicit zeros on the
    # K (input-pixel) tail are load-bearing: Pallas OOB blocks are undefined and
    # NaN * 0 = NaN would poison the matmul accumulation.
    if (R_out != R) or (P_padK != P):
        img_flat = jnp.pad(img_flat, ((0, R_out - R), (0, P_padK - P)))

    # Source-index vector computed once in plain XLA (tiny). Padded entries = -1.
    src = _source_indices(deg, H, W, P_padN).reshape(1, P_padN)

    vmem_cap = _vmem_capacity_bytes()
    vmem_limit = int(min(vmem_cap - (4 << 20), max(vmem_needed + (4 << 20), 32 << 20)))

    img_reads = 1 if n_row_tiles == 1 else n_pix_tiles
    cost = pl.CostEstimate(
        flops=2 * R_out * P_padK * P_padN,
        transcendentals=0,
        bytes_accessed=int(img_reads * R_out * P_padK * jnp.dtype(in_dtype).itemsize
                           + R_out * P_padN * jnp.dtype(out_dtype).itemsize
                           + P_padN * 4),
    )

    grid_spec = pltpu.PrefetchScalarGridSpec(
        num_scalar_prefetch=0,
        grid=(n_pix_tiles, n_row_tiles),       # pixel tile outer, row tile inner
        in_specs=[
            pl.BlockSpec((1, tile_p), lambda pi, ri: (0, pi)),            # src slab
            pl.BlockSpec((tile_rows, P_padK), lambda pi, ri: (ri, 0)),    # img rows
        ],
        out_specs=pl.BlockSpec((tile_rows, tile_p), lambda pi, ri: (ri, pi)),
        scratch_shapes=[pltpu.VMEM((P_padK, tile_p), sel_dtype)],
    )

    out_flat = pl.pallas_call(
        _make_rotate_kernel(P_padK, tile_p, work_dtype),
        out_shape=jax.ShapeDtypeStruct((R_out, P_padN), out_dtype),
        grid_spec=grid_spec,
        compiler_params=pltpu.CompilerParams(
            dimension_semantics=("parallel", "arbitrary"),
            vmem_limit_bytes=vmem_limit,
        ),
        cost_estimate=cost,
    )(src, img_flat)

    return out_flat[:R, :P].reshape(B, C, H, W).astype(orig_dtype)


def random_rotate(image_and_cover, angle=30, key=None):
    """JAX/Pallas equivalent of RandomRotate.forward.

    image_and_cover: (image, cover_image), both NCHW. Only `image` is used.
    Samples an integer angle in [-angle, angle) (like np.random.randint).
    """
    # TODO(synk): np.random.randint is host-side global RNG; replaced with
    # jax.random.randint driven by an explicit PRNG key.
    image, _cover_image = image_and_cover
    if key is None:
        key = jax.random.PRNGKey(0)
    deg = jax.random.randint(key, (), -angle, angle)
    return rotate_pallas(image, deg)


def _rotate_reference(image, deg):
    """Plain-XLA gather reference (same sampling math) for correctness checks."""
    deg = jnp.asarray(deg)
    B, C, H, W = image.shape
    src = _source_indices(deg, H, W, H * W)
    flat = image.reshape(B * C, H * W)
    gathered = jnp.take(flat, jnp.clip(src, 0, H * W - 1), axis=1)
    gathered = jnp.where(src[None, :] >= 0, gathered, 0)
    return gathered.reshape(B, C, H, W).astype(image.dtype)


if __name__ == "__main__":
    key = jax.random.PRNGKey(0)
    k_img, k_cov, k_ang = jax.random.split(key, 3)

    image = jax.random.uniform(k_img, (2, 4, 16, 16), dtype=jnp.float32)
    cover = jax.random.uniform(k_cov, (2, 4, 16, 16), dtype=jnp.float32)

    # Module-equivalent call (random angle).
    out = random_rotate((image, cover), angle=30, key=k_ang)
    jax.block_until_ready(out)
    assert out.shape == image.shape and out.dtype == image.dtype

    # Numerical check vs a plain-XLA gather reference at a fixed angle.
    got = rotate_pallas(image, jnp.int32(17))
    ref = _rotate_reference(image, jnp.int32(17))
    assert jnp.allclose(got, ref, atol=1e-5, rtol=1e-5), float(jnp.max(jnp.abs(got - ref)))

    # Exercise pixel padding (784 -> 896 K / 1024 N), the resident single row
    # slab (tile_rows = 80) and the 2-tile parallel pixel axis.
    img2 = jax.random.uniform(jax.random.PRNGKey(1), (20, 4, 28, 28), dtype=jnp.float32)
    got2 = rotate_pallas(img2, jnp.int32(-23))
    ref2 = _rotate_reference(img2, jnp.int32(-23))
    jax.block_until_ready(got2)
    assert got2.shape == img2.shape
    assert jnp.allclose(got2, ref2, atol=1e-5, rtol=1e-5), float(jnp.max(jnp.abs(got2 - ref2)))

    # bf16 path: 16-row sublane padding, exact 0/1 gather (bit-exact result).
    img3 = jax.random.uniform(jax.random.PRNGKey(2), (1, 3, 16, 16)).astype(jnp.bfloat16)
    got3 = rotate_pallas(img3, jnp.int32(9))
    ref3 = _rotate_reference(img3, jnp.int32(9))
    jax.block_until_ready(got3)
    assert got3.dtype == jnp.bfloat16
    assert jnp.array_equal(got3.astype(jnp.float32), ref3.astype(jnp.float32))

    print("KERNEL_OK")
</pallas_src>

<mosaic_0001>
module attributes {stable_mosaic.version = 11 : i64} {
  func.func @kernel(%arg0: i32, %arg1: i32, %arg2: memref<1x128xi32, #tpu.memory_space<vmem>>, %arg3: memref<8x256xf32, #tpu.memory_space<vmem>>, %arg4: memref<8x128xf32, #tpu.memory_space<vmem>>, %arg5: memref<256x128xf32, #tpu.memory_space<vmem>>) attributes {dimension_semantics = [#tpu.dimension_semantics<parallel>, #tpu.dimension_semantics<arbitrary>], iteration_bounds = array<i64: 2, 1>, scalar_prefetch = 0 : i64, scratch_operands = 1 : i64, tpu.core_type = #tpu.core_type<tc>, window_params = [{transform_indices = @transform_0, window_bounds = array<i64: 1, 128>}, {transform_indices = @transform_1, window_bounds = array<i64: 8, 256>}, {transform_indices = @transform_2, window_bounds = array<i64: 8, 128>}]} {
    %c0_i32 = arith.constant 0 : i32
    %0 = arith.cmpi eq, %arg1, %c0_i32 : i32
    %1 = arith.extui %0 : i1 to i32
    %c0_i32_0 = arith.constant 0 : i32
    %2 = arith.cmpi ne, %1, %c0_i32_0 : i32
    scf.if %2 {
      %7 = tpu.iota {dimensions = array<i32: 0>} : vector<256x128xi32>
      %c0_6 = arith.constant 0 : index
      %c0_7 = arith.constant 0 : index
      %8 = vector.load %arg2[%c0_6, %c0_7] : memref<1x128xi32, #tpu.memory_space<vmem>>, vector<1x128xi32>
      %9 = vector.broadcast %8 : vector<1x128xi32> to vector<256x128xi32>
      %10 = arith.cmpi eq, %7, %9 : vector<256x128xi32>
      %11 = arith.extui %10 : vector<256x128xi1> to vector<256x128xi32>
      %12 = arith.sitofp %11 : vector<256x128xi32> to vector<256x128xf32>
      %c0_8 = arith.constant 0 : index
      %c0_9 = arith.constant 0 : index
      %13 = vector.load %arg5[%c0_8, %c0_9] : memref<256x128xf32, #tpu.memory_space<vmem>>, vector<256x128xf32>
      tpu.vector_store %arg5[%c0_8, %c0_9], %12 {strides = array<i32>} : memref<256x128xf32, #tpu.memory_space<vmem>>, vector<256x128xf32>,
    } else {
    }
    %c0 = arith.constant 0 : index
    %c0_1 = arith.constant 0 : index
    %3 = vector.load %arg3[%c0, %c0_1] : memref<8x256xf32, #tpu.memory_space<vmem>>, vector<8x256xf32>
    %c0_2 = arith.constant 0 : index
    %c0_3 = arith.constant 0 : index
    %4 = vector.load %arg5[%c0_2, %c0_3] : memref<256x128xf32, #tpu.memory_space<vmem>>, vector<256x128xf32>
    %cst = arith.constant dense<0.000000e+00> : vector<8x128xf32>
    %5 = tpu.matmul %3, %4, %cst {dimension_numbers = #tpu.dot_dimension_numbers<[1], [0], [0], [1], [0, 0, 1, 1], [], []>} : vector<8x256xf32>, vector<256x128xf32>, vector<8x128xf32> -> vector<8x128xf32>
    %c0_4 = arith.constant 0 : index
    %c0_5 = arith.constant 0 : index
    %6 = vector.load %arg4[%c0_4, %c0_5] : memref<8x128xf32, #tpu.memory_space<vmem>>, vector<8x128xf32>
    tpu.vector_store %arg4[%c0_4, %c0_5], %5 {strides = array<i32>} : memref<8x128xf32, #tpu.memory_space<vmem>>, vector<8x128xf32>,
    return
  }
  func.func @transform_0(%arg0: i32, %arg1: i32) -> (i32, i32) {
    %c0_i32 = arith.constant 0 : i32
    %c0_i32_0 = arith.constant 0 : i32
    return %c0_i32, %arg0 : i32, i32
  }
  func.func @transform_1(%arg0: i32, %arg1: i32) -> (i32, i32) {
    %c0_i32 = arith.constant 0 : i32
    %c0_i32_0 = arith.constant 0 : i32
    return %arg1, %c0_i32 : i32, i32
  }
  func.func @transform_2(%arg0: i32, %arg1: i32) -> (i32, i32) {
    %c0_i32 = arith.constant 0 : i32
    return %arg1, %arg0 : i32, i32
  }
}

</mosaic_0001>

<llo_original>
// kernel: rotate_pallas.1
$region0: #{rotate_pallas.1}
  #allocation0 [shape = 'u32[]', space=smem, size = 0x4, offset = 0x4, fixed_abs, tag = 'smem constant byte address 0x4 - core index']
  #allocation1 [shape = 'u32[144,128]{1,0:T(1,128)}', space=vmem, size = 0x12000, scoped, tag = 'internal scratch']
  #allocation2 [shape = 'f32[256,128]{1,0:T(8,128)}', space=vmem, size = 0x20000, scoped, tag = 'scratch operand']
  %s0 = inlined_call_operand.vmem [shape: s32[1,256], index: 0, kind: input, shape index: {}]
  %s1 = inlined_call_operand.vmem [shape: f32[8,256], index: 1, kind: input, shape index: {}]
  %s2 = inlined_call_operand.vmem [shape: f32[8,256], index: 2, kind: output, shape index: {}]
  %s3 = sld [smem:[#allocation0]]
  $region45: #{rotate_pallas.1} parent=0
    _
  %s5 = ssub.s32 1, %s3
  %s6 = scalar_select 0, %s5, %s3
  loop: start=0, step=1, limit=4
  $region2: #{rotate_pallas.1} parent=0 // loop_pre_header
    _
  $region3: #{rotate_pallas.1} parent=0 // loop_header
    %s8 = sphi 0, %s12
    %p9 = scmp.ge.s32.totalorder %s8, 4
    %s15 = sphi 0, %s27
    %s16 = sphi 0, %s23
    %s17 = sphi 0, %s15
    %s18 = sphi 0, %s16
    %s19 = sphi 0, %s17
    %s20 = sphi 0, %s18
    %s30 = sphi 0, %s32
    %s33 = sphi 0, %s30
    %s34 = sphi 0, %s33
    %s50 = sphi 0, %s34
    %s56 = sphi 0, %s58
    %s59 = sphi 0, %s56
    %s60 = sphi 0, %s59
    %s76 = sphi 0, %s60
    %s84 = sphi 0, %s86
    %s87 = sphi 0, %s84
    %s88 = sphi 0, %s87
    %s104 = sphi 0, %s88
  $region4: #{rotate_pallas.1} parent=0 // loop_header_branch
    %11 = sbr.rel (%p9) target = $region8
  $region5: #{rotate_pallas.1} parent=0 // loop_body
    %s13 = ssub.s32 %s8, 1
    %s14 = ssub.s32 %s8, 2
    %s21 = sadd.s32 1, %s16
    %p22 = scmp.ge.s32.totalorder %s21, 1
    %s23 = scalar_select %p22, 0, %s21
    %s24 = sadd.s32 1, %s15
    %s25 = scalar_select %p22, %s24, %s15
    %p26 = scmp.ge.s32.totalorder %s25, 2
    %s27 = scalar_select %p26, 0, %s25
    %s28 = ssub.s32 %s15, %s27
    %p29 = scmp.eq.s32.totalorder %s28, 0
    %s31 = sadd.s32 %s30, 1
    %s32 = scalar_select %p29, %s30, %s31
    %p35 = pneg %p29
    %p36 = scmp.eq.s32.totalorder %s8, 1
    %p37 = por %p35, %p36
    %p38 = scmp.ne.s32.totalorder %s30, %s33
    %p39 = scmp.eq.s32.totalorder %s8, 0
    %p40 = por %p38, %p39
    %p41 = scmp.ne.s32.totalorder %s30, %s33
    %p42 = scmp.eq.s32.totalorder %s13, 1
    %p43 = por %p41, %p42
    %p44 = scmp.ne.s32.totalorder %s33, %s34
    %p45 = scmp.eq.s32.totalorder %s13, 0
    %p46 = por %p44, %p45
    %p47 = scmp.ne.s32.totalorder %s33, %s34
    %p48 = scmp.eq.s32.totalorder %s14, 1
    %p49 = por %p47, %p48
    %p51 = scmp.ne.s32.totalorder %s34, %s50
    %p52 = scmp.eq.s32.totalorder %s14, 0
    %p53 = por %p51, %p52
    %s54 = ssub.s32 %s16, %s23
    %p55 = scmp.eq.s32.totalorder %s54, 0
    %s57 = sadd.s32 %s56, 1
    %s58 = scalar_select %p55, %s56, %s57
    %p61 = pneg %p55
    %p62 = scmp.eq.s32.totalorder %s8, 1
    %p63 = por %p61, %p62
    %p64 = scmp.ne.s32.totalorder %s56, %s59
    %p65 = scmp.eq.s32.totalorder %s8, 0
    %p66 = por %p64, %p65
    %p67 = scmp.ne.s32.totalorder %s56, %s59
    %p68 = scmp.eq.s32.totalorder %s13, 1
    %p69 = por %p67, %p68
    %p70 = scmp.ne.s32.totalorder %s59, %s60
    %p71 = scmp.eq.s32.totalorder %s13, 0
    %p72 = por %p70, %p71
    %p73 = scmp.ne.s32.totalorder %s59, %s60
    %p74 = scmp.eq.s32.totalorder %s14, 1
    %p75 = por %p73, %p74
    %p77 = scmp.ne.s32.totalorder %s60, %s76
    %p78 = scmp.eq.s32.totalorder %s14, 0
    %p79 = por %p77, %p78
    %s80 = ssub.s32 %s16, %s23
    %s81 = ssub.s32 %s15, %s27
    %s82 = sor.u32 %s80, %s81
    %p83 = scmp.eq.s32.totalorder %s82, 0
    %s85 = sadd.s32 %s84, 1
    %s86 = scalar_select %p83, %s84, %s85
    %p89 = pneg %p83
    %p90 = scmp.eq.s32.totalorder %s8, 1
    %p91 = por %p89, %p90
    %p92 = scmp.ne.s32.totalorder %s84, %s87
    %p93 = scmp.eq.s32.totalorder %s8, 0
    %p94 = por %p92, %p93
    %p95 = scmp.ne.s32.totalorder %s84, %s87
    %p96 = scmp.eq.s32.totalorder %s13, 1
    %p97 = por %p95, %p96
    %p98 = scmp.ne.s32.totalorder %s87, %s88
    %p99 = scmp.eq.s32.totalorder %s13, 0
    %p100 = por %p98, %p99
    %p101 = scmp.ne.s32.totalorder %s87, %s88
    %p102 = scmp.eq.s32.totalorder %s14, 1
    %p103 = por %p101, %p102
    %p105 = scmp.ne.s32.totalorder %s88, %s104
    %p106 = scmp.eq.s32.totalorder %s14, 0
    %p107 = por %p105, %p106
    %p108 = scmp.le.s32.totalorder 1, %s8
    %p109 = scmp.lt.s32.totalorder %s8, 3
    %p110 = pnand %p108, %p109
    %p111 = pneg %p110
    // Predicated region
    $region9: #{rotate_pallas.1} parent=5 // pred_check
      _
    $region10: #{rotate_pallas.1} parent=5 // pred_check_branch
      %113 = sbr.rel (%p110) target = $region12
    $region11: #{rotate_pallas.1} parent=5 // pred_region
      %s114 = ssub.s32 %s8, 1
      // Predicated region
      $region13: #{rotate_pallas.1} parent=11 // pred_check
        %p115 = pneg %p72
      $region14: #{rotate_pallas.1} parent=11 // pred_check_branch
        %117 = sbr.rel (%p115) target = $region16
      $region15: #{rotate_pallas.1} parent=11 // pred_region
        %p118 = scmp.lt.s32.totalorder %s18, 0
        %s119 = scalar_select %p118, %s18, 0
        %s120 = smul.addr %s119, 2
        %s121 = smul.addr %s120, 8
        %s122 = scalar_lea.vmem %s1, %s121
      $region16: #{rotate_pallas.1} parent=11 // pred_fallthru
        _
    $region12: #{rotate_pallas.1} parent=5 // pred_fallthru
      _
    %p123 = scmp.lt.s32.totalorder %s8, 2
    // Predicated region
    $region17: #{rotate_pallas.1} parent=5 // pred_check
      %p124 = pneg %p123
    $region18: #{rotate_pallas.1} parent=5 // pred_check_branch
      %126 = sbr.rel (%p124) target = $region20
    $region19: #{rotate_pallas.1} parent=5 // pred_region
      // Predicated region
      $region21: #{rotate_pallas.1} parent=19 // pred_check
        %p127 = pneg %p40
      $region22: #{rotate_pallas.1} parent=19 // pred_check_branch
        %129 = sbr.rel (%p127) target = $region24
      $region23: #{rotate_pallas.1} parent=19 // pred_region
        %p130 = scmp.lt.s32.totalorder %s15, 1
        %s131 = scalar_select %p130, %s15, 1
        %s132 = scalar_lea.vmem %s0, %s131
      $region24: #{rotate_pallas.1} parent=19 // pred_fallthru
        _
    $region20: #{rotate_pallas.1} parent=5 // pred_fallthru
      _
    %p133 = scmp.le.s32.totalorder 1, %s8
    %p134 = scmp.lt.s32.totalorder %s8, 3
    %p135 = pnand %p133, %p134
    %p136 = pneg %p135
    // Predicated region
    $region25: #{rotate_pallas.1} parent=5 // pred_check
      _
    $region26: #{rotate_pallas.1} parent=5 // pred_check_branch
      %138 = sbr.rel (%p135) target = $region28
    $region27: #{rotate_pallas.1} parent=5 // pred_region
      %s139 = ssub.s32 %s8, 1
      %p140 = scmp.lt.s32.totalorder %s17, 1
      %s141 = scalar_select %p140, %s17, 1
      %s142 = scalar_lea.vmem %s0, %s141
      %p143 = pneg %p46
      %p144 = pneg %p43
      %p145 = scmp.lt.s32.totalorder %s18, 0
      %s146 = scalar_select %p145, %s18, 0
      %s147 = smul.addr %s146, 2
      %s148 = smul.addr %s147, 8
      %s149 = scalar_lea.vmem %s1, %s148
      %p150 = pneg %p72
      %p151 = pneg %p69
      %p152 = pneg %p100
      %p153 = pneg %p97
      %p154 = scmp.lt.s32.totalorder %s18, 0
      %s155 = scalar_select %p154, %s18, 0
      %p156 = scmp.lt.s32.totalorder %s17, 1
      %s157 = scalar_select %p156, %s17, 1
      %s158 = smul.addr %s155, 2
      %s159 = sadd.s32 %s157, %s158
      %s160 = smul.addr %s159, 8
      %s161 = scalar_lea.vmem %s2, %s160
      %p162 = scmp.lt.s32.totalorder %s17, 1
      %s163 = scalar_select %p162, %s17, 1
      %s164 = scalar_lea.vmem %s0, %s163
      %p165 = scmp.lt.s32.totalorder %s18, 0
      %s166 = scalar_select %p165, %s18, 0
      %s167 = smul.addr %s166, 2
      %s168 = smul.addr %s167, 8
      %s169 = scalar_lea.vmem %s1, %s168
      %p170 = scmp.lt.s32.totalorder %s18, 0
      %s171 = scalar_select %p170, %s18, 0
      %p172 = scmp.lt.s32.totalorder %s17, 1
      %s173 = scalar_select %p172, %s17, 1
      %s174 = smul.addr %s171, 2
      %s175 = sadd.s32 %s173, %s174
      %s176 = smul.addr %s175, 8
      %s177 = scalar_lea.vmem %s2, %s176
      %p178 = scmp.eq.s32.totalorder %s18, 0
      // Predicated region
      $region29: #{rotate_pallas.1} parent=27 // pred_check
        %p179 = pneg %p178
      $region30: #{rotate_pallas.1} parent=27 // pred_check_branch
        %181 = sbr.rel (%p179) target = $region32
      $region31: #{rotate_pallas.1} parent=27 // pred_region
        %v182 = vlaneseq
        %v183 = vshrl.u32 %v182, 7
        %v184 = vadd.s32 %v183, 8
        %v185 = vadd.s32 %v183, 16
        %v186 = vadd.s32 %v183, 24
        %v187 = vadd.s32 %v183, 32
        %v188 = vadd.s32 %v183, 40
        %v189 = vadd.s32 %v183, 48
        %v190 = vadd.s32 %v183, 56
        %v191 = vadd.s32 %v183, 64
        %v192 = vadd.s32 %v183, 72
        %v193 = vadd.s32 %v183, 80
        %v194 = vadd.s32 %v183, 88
        %v195 = vadd.s32 %v183, 96
        %v196 = vadd.s32 %v183, 104
        %v197 = vadd.s32 %v183, 112
        %v198 = vadd.s32 %v183, 120
        %v199 = vadd.s32 %v183, 128
        %v200 = vadd.s32 %v183, 136
        %v201 = vadd.s32 %v183, 144
        %v202 = vadd.s32 %v183, 152
        %v203 = vadd.s32 %v183, 160
        %v204 = vadd.s32 %v183, 168
        %v205 = vadd.s32 %v183, 176
        %v206 = vadd.s32 %v183, 184
        %v207 = vadd.s32 %v183, 192
        %v208 = vadd.s32 %v183, 200
        %v209 = vadd.s32 %v183, 208
        %v210 = vadd.s32 %v183, 216
        %v211 = vadd.s32 %v183, 224
        %v212 = vadd.s32 %v183, 232
        %v213 = vadd.s32 %v183, 240
        %v214 = vadd.s32 %v183, 248
        %v215 = vld [vmem:[%s164] sm:$0x1]
        %v216 = vlaneseq
        %v217 = vshrl.u32 %v216, 7
        %v218 = vsub.s32 0, %v217
        %v219 = vrot.slane %v215, %v218
        %vm220 = vcmp.eq.s32.totalorder %v183, %v219
        %vm221 = vcmp.eq.s32.totalorder %v184, %v219
        %vm222 = vcmp.eq.s32.totalorder %v185, %v219
        %vm223 = vcmp.eq.s32.totalorder %v186, %v219
        %vm224 = vcmp.eq.s32.totalorder %v187, %v219
        %vm225 = vcmp.eq.s32.totalorder %v188, %v219
        %vm226 = vcmp.eq.s32.totalorder %v189, %v219
        %vm227 = vcmp.eq.s32.totalorder %v190, %v219
        %vm228 = vcmp.eq.s32.totalorder %v191, %v219
        %vm229 = vcmp.eq.s32.totalorder %v192, %v219
        %vm230 = vcmp.eq.s32.totalorder %v193, %v219
        %vm231 = vcmp.eq.s32.totalorder %v194, %v219
        %vm232 = vcmp.eq.s32.totalorder %v195, %v219
        %vm233 = vcmp.eq.s32.totalorder %v196, %v219
        %vm234 = vcmp.eq.s32.totalorder %v197, %v219
        %vm235 = vcmp.eq.s32.totalorder %v198, %v219
        %vm236 = vcmp.eq.s32.totalorder %v199, %v219
        %vm237 = vcmp.eq.s32.totalorder %v200, %v219
        %vm238 = vcmp.eq.s32.totalorder %v201, %v219
        %vm239 = vcmp.eq.s32.totalorder %v202, %v219
        %vm240 = vcmp.eq.s32.totalorder %v203, %v219
        %vm241 = vcmp.eq.s32.totalorder %v204, %v219
        %vm242 = vcmp.eq.s32.totalorder %v205, %v219
        %vm243 = vcmp.eq.s32.totalorder %v206, %v219
        %vm244 = vcmp.eq.s32.totalorder %v207, %v219
        %vm245 = vcmp.eq.s32.totalorder %v208, %v219
        %vm246 = vcmp.eq.s32.totalorder %v209, %v219
        %vm247 = vcmp.eq.s32.totalorder %v210, %v219
        %vm248 = vcmp.eq.s32.totalorder %v211, %v219
        %vm249 = vcmp.eq.s32.totalorder %v212, %v219
        %vm250 = vcmp.eq.s32.totalorder %v213, %v219
        %vm251 = vcmp.eq.s32.totalorder %v214, %v219
        %v252 = vsel %vm220, 1, 0
        %v253 = vsel %vm221, 1, 0
        %v254 = vsel %vm222, 1, 0
        %v255 = vsel %vm223, 1, 0
        %v256 = vsel %vm224, 1, 0
        %v257 = vsel %vm225, 1, 0
        %v258 = vsel %vm226, 1, 0
        %v259 = vsel %vm227, 1, 0
        %v260 = vsel %vm228, 1, 0
        %v261 = vsel %vm229, 1, 0
        %v262 = vsel %vm230, 1, 0
        %v263 = vsel %vm231, 1, 0
        %v264 = vsel %vm232, 1, 0
        %v265 = vsel %vm233, 1, 0
        %v266 = vsel %vm234, 1, 0
        %v267 = vsel %vm235, 1, 0
        %v268 = vsel %vm236, 1, 0
        %v269 = vsel %vm237, 1, 0
        %v270 = vsel %vm238, 1, 0
        %v271 = vsel %vm239, 1, 0
        %v272 = vsel %vm240, 1, 0
        %v273 = vsel %vm241, 1, 0
        %v274 = vsel %vm242, 1, 0
        %v275 = vsel %vm243, 1, 0
        %v276 = vsel %vm244, 1, 0
        %v277 = vsel %vm245, 1, 0
        %v278 = vsel %vm246, 1, 0
        %v279 = vsel %vm247, 1, 0
        %v280 = vsel %vm248, 1, 0
        %v281 = vsel %vm249, 1, 0
        %v282 = vsel %vm250, 1, 0
        %v283 = vsel %vm251, 1, 0
        %v284 = vcvt.s32.f32 %v252
        %v285 = vcvt.s32.f32 %v253
        %v286 = vcvt.s32.f32 %v254
        %v287 = vcvt.s32.f32 %v255
        %v288 = vcvt.s32.f32 %v256
        %v289 = vcvt.s32.f32 %v257
        %v290 = vcvt.s32.f32 %v258
        %v291 = vcvt.s32.f32 %v259
        %v292 = vcvt.s32.f32 %v260
        %v293 = vcvt.s32.f32 %v261
        %v294 = vcvt.s32.f32 %v262
        %v295 = vcvt.s32.f32 %v263
        %v296 = vcvt.s32.f32 %v264
        %v297 = vcvt.s32.f32 %v265
        %v298 = vcvt.s32.f32 %v266
        %v299 = vcvt.s32.f32 %v267
        %v300 = vcvt.s32.f32 %v268
        %v301 = vcvt.s32.f32 %v269
        %v302 = vcvt.s32.f32 %v270
        %v303 = vcvt.s32.f32 %v271
        %v304 = vcvt.s32.f32 %v272
        %v305 = vcvt.s32.f32 %v273
        %v306 = vcvt.s32.f32 %v274
        %v307 = vcvt.s32.f32 %v275
        %v308 = vcvt.s32.f32 %v276
        %v309 = vcvt.s32.f32 %v277
        %v310 = vcvt.s32.f32 %v278
        %v311 = vcvt.s32.f32 %v279
        %v312 = vcvt.s32.f32 %v280
        %v313 = vcvt.s32.f32 %v281
        %v314 = vcvt.s32.f32 %v282
        %v315 = vcvt.s32.f32 %v283
        %316 = vst [vmem:[#allocation2] sm:$0xff] %v284
        %317 = vst [vmem:[#allocation2 + $0x8] sm:$0xff] %v285
        %318 = vst [vmem:[#allocation2 + $0x10] sm:$0xff] %v286
        %319 = vst [vmem:[#allocation2 + $0x18] sm:$0xff] %v287
        %320 = vst [vmem:[#allocation2 + $0x20] sm:$0xff] %v288
        %321 = vst [vmem:[#allocation2 + $0x28] sm:$0xff] %v289
        %322 = vst [vmem:[#allocation2 + $0x30] sm:$0xff] %v290
        %323 = vst [vmem:[#allocation2 + $0x38] sm:$0xff] %v291
        %324 = vst [vmem:[#allocation2 + $0x40] sm:$0xff] %v292
        %325 = vst [vmem:[#allocation2 + $0x48] sm:$0xff] %v293
        %326 = vst [vmem:[#allocation2 + $0x50] sm:$0xff] %v294
        %327 = vst [vmem:[#allocation2 + $0x58] sm:$0xff] %v295
        %328 = vst [vmem:[#allocation2 + $0x60] sm:$0xff] %v296
        %329 = vst [vmem:[#allocation2 + $0x68] sm:$0xff] %v297
        %330 = vst [vmem:[#allocation2 + $0x70] sm:$0xff] %v298
        %331 = vst [vmem:[#allocation2 + $0x78] sm:$0xff] %v299
        %332 = vst [vmem:[#allocation2 + $0x80] sm:$0xff] %v300
        %333 = vst [vmem:[#allocation2 + $0x88] sm:$0xff] %v301
        %334 = vst [vmem:[#allocation2 + $0x90] sm:$0xff] %v302
        %335 = vst [vmem:[#allocation2 + $0x98] sm:$0xff] %v303
        %336 = vst [vmem:[#allocation2 + $0xa0] sm:$0xff] %v304
        %337 = vst [vmem:[#allocation2 + $0xa8] sm:$0xff] %v305
        %338 = vst [vmem:[#allocation2 + $0xb0] sm:$0xff] %v306
        %339 = vst [vmem:[#allocation2 + $0xb8] sm:$0xff] %v307
        %340 = vst [vmem:[#allocation2 + $0xc0] sm:$0xff] %v308
        %341 = vst [vmem:[#allocation2 + $0xc8] sm:$0xff] %v309
        %342 = vst [vmem:[#allocation2 + $0xd0] sm:$0xff] %v310
        %343 = vst [vmem:[#allocation2 + $0xd8] sm:$0xff] %v311
        %344 = vst [vmem:[#allocation2 + $0xe0] sm:$0xff] %v312
        %345 = vst [vmem:[#allocation2 + $0xe8] sm:$0xff] %v313
        %346 = vst [vmem:[#allocation2 + $0xf0] sm:$0xff] %v314
        %347 = vst [vmem:[#allocation2 + $0xf8] sm:$0xff] %v315
      $region32: #{rotate_pallas.1} parent=27 // pred_fallthru
        _
      %v348 = vld [vmem:[%s169] sm:$0xff]
      %v349 = vld [vmem:[%s169 + $0x8] sm:$0xff]
      %v350 = vld [vmem:[#allocation2] sm:$0xff]
      %v351 = vld [vmem:[#allocation2 + $0x8] sm:$0xff]
      %v352 = vld [vmem:[#allocation2 + $0x10] sm:$0xff]
      %v353 = vld [vmem:[#allocation2 + $0x18] sm:$0xff]
      %v354 = vld [vmem:[#allocation2 + $0x20] sm:$0xff]
      %v355 = vld [vmem:[#allocation2 + $0x28] sm:$0xff]
      %v356 = vld [vmem:[#allocation2 + $0x30] sm:$0xff]
      %v357 = vld [vmem:[#allocation2 + $0x38] sm:$0xff]
      %v358 = vld [vmem:[#allocation2 + $0x40] sm:$0xff]
      %v359 = vld [vmem:[#allocation2 + $0x48] sm:$0xff]
      %v360 = vld [vmem:[#allocation2 + $0x50] sm:$0xff]
      %v361 = vld [vmem:[#allocation2 + $0x58] sm:$0xff]
      %v362 = vld [vmem:[#allocation2 + $0x60] sm:$0xff]
      %v363 = vld [vmem:[#allocation2 + $0x68] sm:$0xff]
      %v364 = vld [vmem:[#allocation2 + $0x70] sm:$0xff]
      %v365 = vld [vmem:[#allocation2 + $0x78] sm:$0xff]
      %v366 = vld [vmem:[#allocation2 + $0x80] sm:$0xff]
      %v367 = vld [vmem:[#allocation2 + $0x88] sm:$0xff]
      %v368 = vld [vmem:[#allocation2 + $0x90] sm:$0xff]
      %v369 = vld [vmem:[#allocation2 + $0x98] sm:$0xff]
      %v370 = vld [vmem:[#allocation2 + $0xa0] sm:$0xff]
      %v371 = vld [vmem:[#allocation2 + $0xa8] sm:$0xff]
      %v372 = vld [vmem:[#allocation2 + $0xb0] sm:$0xff]
      %v373 = vld [vmem:[#allocation2 + $0xb8] sm:$0xff]
      %v374 = vld [vmem:[#allocation2 + $0xc0] sm:$0xff]
      %v375 = vld [vmem:[#allocation2 + $0xc8] sm:$0xff]
      %v376 = vld [vmem:[#allocation2 + $0xd0] sm:$0xff]
      %v377 = vld [vmem:[#allocation2 + $0xd8] sm:$0xff]
      %v378 = vld [vmem:[#allocation2 + $0xe0] sm:$0xff]
      %v379 = vld [vmem:[#allocation2 + $0xe8] sm:$0xff]
      %v380 = vld [vmem:[#allocation2 + $0xf0] sm:$0xff]
      %v381 = vld [vmem:[#allocation2 + $0xf8] sm:$0xff]
      %382 = vmatprep.subr.mxu0 0.0
      %383 = vmatpush1.msra.mxu0 %v365
      %384 = vmatprep.subr.mxu0 0.0
      %385 = vmatpush1.msra.mxu0 %v364
      %386 = vmatprep.subr.mxu0 0.0
      %387 = vmatpush1.msra.mxu0 %v363
      %388 = vmatprep.subr.mxu0 0.0
      %389 = vmatpush1.msra.mxu0 %v362
      %390 = vmatprep.subr.mxu0 0.0
      %391 = vmatpush1.msra.mxu0 %v361
      %392 = vmatprep.subr.mxu0 0.0
      %393 = vmatpush1.msra.mxu0 %v360
      %394 = vmatprep.subr.mxu0 0.0
      %395 = vmatpush1.msra.mxu0 %v359
      %396 = vmatprep.subr.mxu0 0.0
      %397 = vmatpush1.msra.mxu0 %v358
      %398 = vmatprep.subr.mxu0 0.0
      %399 = vmatpush1.msra.mxu0 %v357
      %400 = vmatprep.subr.mxu0 0.0
      %401 = vmatpush1.msra.mxu0 %v356
      %402 = vmatprep.subr.mxu0 0.0
      %403 = vmatpush1.msra.mxu0 %v355
      %404 = vmatprep.subr.mxu0 0.0
      %405 = vmatpush1.msra.mxu0 %v354
      %406 = vmatprep.subr.mxu0 0.0
      %407 = vmatpush1.msra.mxu0 %v353
      %408 = vmatprep.subr.mxu0 0.0
      %409 = vmatpush1.msra.mxu0 %v352
      %410 = vmatprep.subr.mxu0 0.0
      %411 = vmatpush1.msra.mxu0 %v351
      %412 = vmatprep.subr.mxu0 0.0
      %413 = vmatpush1.msra.mxu0 %v350
      %414 = vmatprep.subr.mxu0 0.0
      %415 = vmatpush2.msra.mxu0 %v381
      %416 = vmatprep.subr.mxu0 0.0
      %417 = vmatpush2.msra.mxu0 %v380
      %418 = vmatprep.subr.mxu0 0.0
      %419 = vmatpush2.msra.mxu0 %v379
      %420 = vmatprep.subr.mxu0 0.0
      %421 = vmatpush2.msra.mxu0 %v378
      %422 = vmatprep.subr.mxu0 0.0
      %423 = vmatpush2.msra.mxu0 %v377
      %424 = vmatprep.subr.mxu0 0.0
      %425 = vmatpush2.msra.mxu0 %v376
      %426 = vmatprep.subr.mxu0 0.0
      %427 = vmatpush2.msra.mxu0 %v375
      %428 = vmatprep.subr.mxu0 0.0
      %429 = vmatpush2.msra.mxu0 %v374
      %430 = vmatprep.subr.mxu0 0.0
      %431 = vmatpush2.msra.mxu0 %v373
      %432 = vmatprep.subr.mxu0 0.0
      %433 = vmatpush2.msra.mxu0 %v372
      %434 = vmatprep.subr.mxu0 0.0
      %435 = vmatpush2.msra.mxu0 %v371
      %436 = vmatprep.subr.mxu0 0.0
      %437 = vmatpush2.msra.mxu0 %v370
      %438 = vmatprep.subr.mxu0 0.0
      %439 = vmatpush2.msra.mxu0 %v369
      %440 = vmatprep.subr.mxu0 0.0
      %441 = vmatpush2.msra.mxu0 %v368
      %442 = vmatprep.subr.mxu0 0.0
      %443 = vmatpush2.msra.mxu0 %v367
      %444 = vmatprep.subr.mxu0 0.0
      %445 = vmatpush2.msra.mxu0 %v366
      %446 = vmatprep.mubr.f32.mxu0 %v349
      %447 = vmatmul.mubr.f32.gmra.mxu0 %v348
      %v448 = vpop.f32.mrf.mxu0
      %v449 = vadd.f32 0.0, %v448
      %v450 = vpop.f32.mrf.mxu0
      %451 = vdwg.mxu0
      %452 = vst [vmem:[%s177] sm:$0xff] %v449
      %p453 = scmp.lt.s32.totalorder %s18, 0
      %s454 = scalar_select %p453, %s18, 0
      %p455 = scmp.lt.s32.totalorder %s17, 1
      %s456 = scalar_select %p455, %s17, 1
      %s457 = smul.addr %s454, 2
      %s458 = sadd.s32 %s456, %s457
      %s459 = smul.addr %s458, 8
      %s460 = scalar_lea.vmem %s2, %s459
      // Predicated region
      $region33: #{rotate_pallas.1} parent=27 // pred_check
        %p461 = pneg %p97
      $region34: #{rotate_pallas.1} parent=27 // pred_check_branch
        %463 = sbr.rel (%p461) target = $region36
      $region35: #{rotate_pallas.1} parent=27 // pred_region
        _
      $region36: #{rotate_pallas.1} parent=27 // pred_fallthru
        _
    $region28: #{rotate_pallas.1} parent=5 // pred_fallthru
      _
    %p464 = scmp.le.s32.totalorder 2, %s8
    // Predicated region
    $region37: #{rotate_pallas.1} parent=5 // pred_check
      %p465 = pneg %p464
    $region38: #{rotate_pallas.1} parent=5 // pred_check_branch
      %467 = sbr.rel (%p465) target = $region40
    $region39: #{rotate_pallas.1} parent=5 // pred_region
      %s468 = ssub.s32 %s8, 2
      // Predicated region
      $region41: #{rotate_pallas.1} parent=39 // pred_check
        %p469 = pneg %p103
      $region42: #{rotate_pallas.1} parent=39 // pred_check_branch
        %471 = sbr.rel (%p469) target = $region44
      $region43: #{rotate_pallas.1} parent=39 // pred_region
        %p472 = scmp.lt.s32.totalorder %s20, 0
        %s473 = scalar_select %p472, %s20, 0
        %p474 = scmp.lt.s32.totalorder %s19, 1
        %s475 = scalar_select %p474, %s19, 1
        %s476 = smul.addr %s473, 2
        %s477 = sadd.s32 %s475, %s476
        %s478 = smul.addr %s477, 8
        %s479 = scalar_lea.vmem %s2, %s478
      $region44: #{rotate_pallas.1} parent=39 // pred_fallthru
        _
    $region40: #{rotate_pallas.1} parent=5 // pred_fallthru
      _
  $region6: #{rotate_pallas.1} parent=0 // loop_footer
    %s12 = sadd.s32 1, %s8
  $region7: #{rotate_pallas.1} parent=0 // loop_footer_branch
    %7 = sbr.rel target = $region3
  $region8: #{rotate_pallas.1} parent=0 // loop_exit
    _

</llo_original>
